<compile_context>
chip_gen: v7x
topology: tpu7x:2x2x1
jax: 0.10.0
libtpu: 0.0.40
codegen_flags: <defaults>
</compile_context>

<pallas_src>
import functools

import jax
import jax.numpy as jnp
from jax.experimental import pallas as pl
from jax.experimental.pallas import tpu as pltpu

WEIGHT_VALUE = 0.1  # torch.nn.init.constant_(layer.weight, 0.1)


def _conv3x3_kernel(w_ref, x_ref, o_ref, *, H, W):
    """3x3 'same' conv, 1 in / 1 out channel, no bias, on flattened (Nb, H*W) tiles.

    w_ref: (9,) float32 weights in SMEM (row-major 3x3).
    x_ref: (Nb, H*W) input tile in VMEM (lane-dense last dim).
    o_ref: (Nb, H*W) output tile in VMEM.
    """
    nb, L = x_ref.shape  # L == H * W (static)

    x = x_ref[...].astype(jnp.float32)  # single load, single cast

    # Flat pixel index of every lane position (computed once per tile).
    lane = jax.lax.broadcasted_iota(jnp.int32, (nb, L), 1)
    col = lane % W
    left_ok = col >= 1            # neighbour (row, col-1) exists
    right_ok = col <= W - 2       # neighbour (row, col+1) exists
    up_ok = lane >= W             # neighbour (row-1, col) exists
    down_ok = lane < L - W        # neighbour (row+1, col) exists

    # Column-shifted taps, shared by all three kernel rows (2 rolls, 2 selects).
    # tap_l[k] = x[k-1], tap_r[k] = x[k+1]; out-of-image values zeroed (padding).
    x_l = jnp.where(left_ok, pltpu.roll(x, shift=1, axis=1), 0.0)
    x_r = jnp.where(right_ok, pltpu.roll(x, shift=L - 1, axis=1), 0.0)

    # Hoist the 9 scalar SMEM weight reads.
    w = [w_ref[k] for k in range(9)]

    # Middle kernel row (di = 0): no row shift / mask needed.
    acc = w[3] * x_l + w[4] * x + w[5] * x_r
    # Top kernel row (di = -1): samples row-1 -> roll forward by W, mask row 0.
    top = w[0] * x_l + w[1] * x + w[2] * x_r
    acc = acc + jnp.where(up_ok, pltpu.roll(top, shift=W, axis=1), 0.0)
    # Bottom kernel row (di = +1): samples row+1 -> roll backward by W, mask row H-1.
    bot = w[6] * x_l + w[7] * x + w[8] * x_r
    acc = acc + jnp.where(down_ok, pltpu.roll(bot, shift=L - W, axis=1), 0.0)

    o_ref[...] = acc.astype(o_ref.dtype)


def torch_conv_forward(x, weight):
    """x: (N, 1, H, W); weight: (1, 1, 3, 3). Returns (N, 1, H, W), matching the PyTorch module."""
    N, C, H, W = x.shape
    assert C == 1, "TorchConv is Conv2d(1, 1, ...)"
    L = H * W

    xf = x.reshape(N, L)                        # contiguous -> free reshape, no pad copy
    wf = weight.reshape(9).astype(jnp.float32)  # tiny 1-D SMEM-resident weights

    # Batch tile size: keep one block around <=4 MiB so 2 x (in + out) double buffers
    # fit comfortably in v7x's 64 MiB VMEM (and far under v5e/v6e's 128 MiB).
    bytes_per_img = L * x.dtype.itemsize
    nb = min(N, max(1, (4 * 1024 * 1024) // bytes_per_img))
    if nb < N:
        # Keep the sublane dim a multiple of 8 when actually tiling over batch.
        nb = max(8, (nb // 8) * 8)

    grid = (pl.cdiv(N, nb),)
    kernel = functools.partial(_conv3x3_kernel, H=H, W=W)

    out = pl.pallas_call(
        kernel,
        out_shape=jax.ShapeDtypeStruct((N, L), x.dtype),
        grid_spec=pltpu.PrefetchScalarGridSpec(
            num_scalar_prefetch=0,
            grid=grid,
            in_specs=[
                pl.BlockSpec(memory_space=pltpu.MemorySpace.SMEM),   # weights (9,)
                pl.BlockSpec((nb, L), lambda i: (i, 0)),             # input batch tile
            ],
            out_specs=pl.BlockSpec((nb, L), lambda i: (i, 0)),
        ),
        compiler_params=pltpu.CompilerParams(
            # Batch tiles are independent: lets v7x shard them across its 2 TensorCores;
            # harmless no-op on single-TC v5e/v6e.
            dimension_semantics=("parallel",),
        ),
        cost_estimate=pl.CostEstimate(
            flops=18 * N * L,
            transcendentals=0,
            bytes_accessed=2 * N * L * x.dtype.itemsize + 9 * 4,
        ),
    )(wf, xf)

    return out.reshape(N, 1, H, W)


if __name__ == "__main__":
    key = jax.random.PRNGKey(0)
    N, C, H, W = 2, 1, 16, 16
    x = jax.random.normal(key, (N, C, H, W), dtype=jnp.float32)

    # Deterministic parameter init: constant filler, value = 0.1, shape (out_c, in_c, kh, kw).
    weight = jnp.full((1, 1, 3, 3), WEIGHT_VALUE, dtype=jnp.float32)

    y = torch_conv_forward(x, weight)
    jax.block_until_ready(y)

    # Reference: same semantics as torch.nn.Conv2d(1,1,3,stride=1,padding=1,bias=False).
    y_ref = jax.lax.conv_general_dilated(
        x, weight, window_strides=(1, 1), padding=((1, 1), (1, 1)),
        dimension_numbers=("NCHW", "OIHW", "NCHW"))
    assert y.shape == (N, C, H, W)
    assert jnp.allclose(y, y_ref, atol=1e-5, rtol=1e-5)

    print("KERNEL_OK")
</pallas_src>

<mosaic_0001>
module attributes {stable_mosaic.version = 11 : i64} {
  func.func @_conv3x3_kernel(%arg0: i32, %arg1: memref<9xf32, #tpu.memory_space<smem>>, %arg2: memref<2x256xf32, #tpu.memory_space<vmem>>, %arg3: memref<2x256xf32, #tpu.memory_space<vmem>>) attributes {dimension_semantics = [#tpu.dimension_semantics<parallel>], iteration_bounds = array<i64: 1>, scalar_prefetch = 0 : i64, scratch_operands = 0 : i64, tpu.core_type = #tpu.core_type<tc>, window_params = [{transform_indices = @transform_0, window_bounds = array<i64: 9>}, {transform_indices = @transform_1, window_bounds = array<i64: 2, 256>}, {transform_indices = @transform_2, window_bounds = array<i64: 2, 256>}]} {
    %c0 = arith.constant 0 : index
    %c0_0 = arith.constant 0 : index
    %0 = vector.load %arg2[%c0, %c0_0] : memref<2x256xf32, #tpu.memory_space<vmem>>, vector<2x256xf32>
    %1 = tpu.iota {dimensions = array<i32: 1>} : vector<2x256xi32>
    %c16_i32 = arith.constant 16 : i32
    %c0_i32 = arith.constant 0 : i32
    %2 = arith.cmpi eq, %c16_i32, %c0_i32 : i32
    %c1_i32 = arith.constant 1 : i32
    %3 = arith.select %2, %c1_i32, %c16_i32 : i32
    %4 = vector.broadcast %3 : i32 to vector<2x256xi32>
    %5 = arith.remsi %1, %4 : vector<2x256xi32>
    %c0_i32_1 = arith.constant 0 : i32
    %6 = vector.broadcast %c0_i32_1 : i32 to vector<2x256xi32>
    %7 = arith.cmpi ne, %5, %6 : vector<2x256xi32>
    %c0_i32_2 = arith.constant 0 : i32
    %8 = vector.broadcast %c0_i32_2 : i32 to vector<2x256xi32>
    %9 = arith.cmpi slt, %5, %8 : vector<2x256xi32>
    %c0_i32_3 = arith.constant 0 : i32
    %10 = arith.cmpi slt, %3, %c0_i32_3 : i32
    %11 = vector.broadcast %10 : i1 to vector<2x256xi1>
    %12 = vector.broadcast %11 : vector<2x256xi1> to vector<2x256xi1>
    %13 = arith.xori %9, %12 : vector<2x256xi1>
    %14 = arith.andi %13, %7 : vector<2x256xi1>
    %15 = vector.broadcast %3 : i32 to vector<2x256xi32>
    %16 = arith.addi %5, %15 : vector<2x256xi32>
    %17 = arith.select %14, %16, %5 : vector<2x256xi1>, vector<2x256xi32>
    %c1_i32_4 = arith.constant 1 : i32
    %18 = vector.broadcast %c1_i32_4 : i32 to vector<2x256xi32>
    %19 = arith.cmpi sge, %17, %18 : vector<2x256xi32>
    %c14_i32 = arith.constant 14 : i32
    %20 = vector.broadcast %c14_i32 : i32 to vector<2x256xi32>
    %21 = arith.cmpi sle, %17, %20 : vector<2x256xi32>
    %c16_i32_5 = arith.constant 16 : i32
    %22 = vector.broadcast %c16_i32_5 : i32 to vector<2x256xi32>
    %23 = arith.cmpi sge, %1, %22 : vector<2x256xi32>
    %c240_i32 = arith.constant 240 : i32
    %24 = vector.broadcast %c240_i32 : i32 to vector<2x256xi32>
    %25 = arith.cmpi slt, %1, %24 : vector<2x256xi32>
    %c1_i32_6 = arith.constant 1 : i32
    %26 = tpu.dynamic_rotate %0 by %c1_i32_6 dim 1 : vector<2x256xf32>, i32 -> vector<2x256xf32>
    %cst = arith.constant 0.000000e+00 : f32
    %27 = vector.broadcast %cst : f32 to vector<2x256xf32>
    %28 = arith.select %19, %26, %27 : vector<2x256xi1>, vector<2x256xf32>
    %c255_i32 = arith.constant 255 : i32
    %29 = tpu.dynamic_rotate %0 by %c255_i32 dim 1 : vector<2x256xf32>, i32 -> vector<2x256xf32>
    %cst_7 = arith.constant 0.000000e+00 : f32
    %30 = vector.broadcast %cst_7 : f32 to vector<2x256xf32>
    %31 = arith.select %21, %29, %30 : vector<2x256xi1>, vector<2x256xf32>
    %c0_8 = arith.constant 0 : index
    %32 = memref.load %arg1[%c0_8] : memref<9xf32, #tpu.memory_space<smem>>
    %c1 = arith.constant 1 : index
    %33 = memref.load %arg1[%c1] : memref<9xf32, #tpu.memory_space<smem>>
    %c2 = arith.constant 2 : index
    %34 = memref.load %arg1[%c2] : memref<9xf32, #tpu.memory_space<smem>>
    %c3 = arith.constant 3 : index
    %35 = memref.load %arg1[%c3] : memref<9xf32, #tpu.memory_space<smem>>
    %c4 = arith.constant 4 : index
    %36 = memref.load %arg1[%c4] : memref<9xf32, #tpu.memory_space<smem>>
    %c5 = arith.constant 5 : index
    %37 = memref.load %arg1[%c5] : memref<9xf32, #tpu.memory_space<smem>>
    %c6 = arith.constant 6 : index
    %38 = memref.load %arg1[%c6] : memref<9xf32, #tpu.memory_space<smem>>
    %c7 = arith.constant 7 : index
    %39 = memref.load %arg1[%c7] : memref<9xf32, #tpu.memory_space<smem>>
    %c8 = arith.constant 8 : index
    %40 = memref.load %arg1[%c8] : memref<9xf32, #tpu.memory_space<smem>>
    %41 = vector.broadcast %35 : f32 to vector<2x256xf32>
    %42 = arith.mulf %41, %28 : vector<2x256xf32>
    %43 = vector.broadcast %36 : f32 to vector<2x256xf32>
    %44 = arith.mulf %43, %0 : vector<2x256xf32>
    %45 = arith.addf %42, %44 : vector<2x256xf32>
    %46 = vector.broadcast %37 : f32 to vector<2x256xf32>
    %47 = arith.mulf %46, %31 : vector<2x256xf32>
    %48 = arith.addf %45, %47 : vector<2x256xf32>
    %49 = vector.broadcast %32 : f32 to vector<2x256xf32>
    %50 = arith.mulf %49, %28 : vector<2x256xf32>
    %51 = vector.broadcast %33 : f32 to vector<2x256xf32>
    %52 = arith.mulf %51, %0 : vector<2x256xf32>
    %53 = arith.addf %50, %52 : vector<2x256xf32>
    %54 = vector.broadcast %34 : f32 to vector<2x256xf32>
    %55 = arith.mulf %54, %31 : vector<2x256xf32>
    %56 = arith.addf %53, %55 : vector<2x256xf32>
    %c16_i32_9 = arith.constant 16 : i32
    %57 = tpu.dynamic_rotate %56 by %c16_i32_9 dim 1 : vector<2x256xf32>, i32 -> vector<2x256xf32>
    %cst_10 = arith.constant 0.000000e+00 : f32
    %58 = vector.broadcast %cst_10 : f32 to vector<2x256xf32>
    %59 = arith.select %23, %57, %58 : vector<2x256xi1>, vector<2x256xf32>
    %60 = arith.addf %48, %59 : vector<2x256xf32>
    %61 = vector.broadcast %38 : f32 to vector<2x256xf32>
    %62 = arith.mulf %61, %28 : vector<2x256xf32>
    %63 = vector.broadcast %39 : f32 to vector<2x256xf32>
    %64 = arith.mulf %63, %0 : vector<2x256xf32>
    %65 = arith.addf %62, %64 : vector<2x256xf32>
    %66 = vector.broadcast %40 : f32 to vector<2x256xf32>
    %67 = arith.mulf %66, %31 : vector<2x256xf32>
    %68 = arith.addf %65, %67 : vector<2x256xf32>
    %c240_i32_11 = arith.constant 240 : i32
    %69 = tpu.dynamic_rotate %68 by %c240_i32_11 dim 1 : vector<2x256xf32>, i32 -> vector<2x256xf32>
    %cst_12 = arith.constant 0.000000e+00 : f32
    %70 = vector.broadcast %cst_12 : f32 to vector<2x256xf32>
    %71 = arith.select %25, %69, %70 : vector<2x256xi1>, vector<2x256xf32>
    %72 = arith.addf %60, %71 : vector<2x256xf32>
    %c0_13 = arith.constant 0 : index
    %c0_14 = arith.constant 0 : index
    %73 = vector.load %arg3[%c0_13, %c0_14] : memref<2x256xf32, #tpu.memory_space<vmem>>, vector<2x256xf32>
    tpu.vector_store %arg3[%c0_13, %c0_14], %72 {strides = array<i32>} : memref<2x256xf32, #tpu.memory_space<vmem>>, vector<2x256xf32>,
    return
  }
  func.func @transform_0(%arg0: i32) -> i32 {
    %c0_i32 = arith.constant 0 : i32
    %c0_i32_0 = arith.constant 0 : i32
    return %c0_i32 : i32
  }
  func.func @transform_1(%arg0: i32) -> (i32, i32) {
    %c0_i32 = arith.constant 0 : i32
    %c0_i32_0 = arith.constant 0 : i32
    return %arg0, %c0_i32 : i32, i32
  }
  func.func @transform_2(%arg0: i32) -> (i32, i32) {
    %c0_i32 = arith.constant 0 : i32
    %c0_i32_0 = arith.constant 0 : i32
    return %arg0, %c0_i32 : i32, i32
  }
}

</mosaic_0001>

<llo_original>
// kernel: tpu_custom_call.1
$region0: #{tpu_custom_call.1}
  #allocation0 [shape = 'u32[]', space=smem, size = 0x4, offset = 0x4, fixed_abs, tag = 'smem constant byte address 0x4 - core index']
  #allocation1 [shape = 'u32[144,128]{1,0:T(1,128)}', space=vmem, size = 0x12000, scoped, tag = 'internal scratch']
  %s0 = inlined_call_operand.hbm [shape: f32[9], index: 0, kind: input, shape index: {}]
  %s1 = inlined_call_operand.hbm [shape: f32[2,256], index: 1, kind: input, shape index: {}]
  %s2 = inlined_call_operand.hbm [shape: f32[2,256], index: 2, kind: output, shape index: {}]
  %s3 = sld [smem:[#allocation0]]
  $region26: #{tpu_custom_call.1} parent=0
    _
  %s5 = ssub.s32 1, %s3
  %s6 = scalar_select 0, %s5, %s3
  $region1: #{tpu_custom_call.1} parent=0
    #allocation2 [shape = 'u8[512]{0}', space=smem, size = 0x200, scoped, tag = 'input window, operand 0, single buffered']
    #allocation3 [shape = 's32[1]{0}', space=sflag, size = 0x4, scoped, tag = 'scoped memory for tpu_custom_call.1']
    #allocation4 [shape = 's32[1]{0}', space=sflag, size = 0x4, scoped, tag = 'scoped memory for tpu_custom_call.1']
    #allocation5 [shape = 's32[1]{0}', space=sflag, size = 0x4, scoped, tag = 'scoped memory for tpu_custom_call.1']
    #allocation6 [shape = 'u8[2048]{0}', space=vmem, size = 0x800, scoped, tag = 'input window, operand 1, single buffered']
    #allocation7 [shape = 'u8[2048]{0}', space=vmem, size = 0x800, scoped, tag = 'output window, operand 0, single buffered']
    %7 = vsyncpa [#allocation5], 0
    %8 = vsyncpa [#allocation3], 0
    %9 = vsyncpa [#allocation4], 0
    // Predicated region
    $region2: #{tpu_custom_call.1} parent=1 // pred_check
      _
    $region3: #{tpu_custom_call.1} parent=1 // pred_check_branch
      %11 = sbr.rel (0) target = $region5
    $region4: #{tpu_custom_call.1} parent=1 // pred_region
      %s13 = ssub.s32 16, 16
      %14 = vsyncadd [#allocation5], %s13
      %17 = dma.hbm_to_smem %s0, 16, [#allocation2], [#allocation5]
    $region5: #{tpu_custom_call.1} parent=1 // pred_fallthru
      _
    // Predicated region
    $region6: #{tpu_custom_call.1} parent=1 // pred_check
      _
    $region7: #{tpu_custom_call.1} parent=1 // pred_check_branch
      %19 = sbr.rel (0) target = $region9
    $region8: #{tpu_custom_call.1} parent=1 // pred_region
      %s21 = ssub.s32 64, 64
      %22 = vsyncadd [#allocation3], %s21
      %s24 = sshll.u32 [#allocation6], 4
      %s25 = int_to_ptr.vmem [resolvable:$true] %s24
      %27 = dma.hbm_to_vmem [thread:$0]  %s1, 64, %s25, [#allocation3]
    $region9: #{tpu_custom_call.1} parent=1 // pred_fallthru
      _
    // Predicated region
    $region10: #{tpu_custom_call.1} parent=1 // pred_check
      _
    $region11: #{tpu_custom_call.1} parent=1 // pred_check_branch
      %29 = sbr.rel (0) target = $region13
    $region12: #{tpu_custom_call.1} parent=1 // pred_region
      %30 = dma.done [#allocation5], 16
    $region13: #{tpu_custom_call.1} parent=1 // pred_fallthru
      _
    // Predicated region
    $region14: #{tpu_custom_call.1} parent=1 // pred_check
      _
    $region15: #{tpu_custom_call.1} parent=1 // pred_check_branch
      %32 = sbr.rel (0) target = $region17
    $region16: #{tpu_custom_call.1} parent=1 // pred_region
      %33 = dma.done [#allocation3], 64
    $region17: #{tpu_custom_call.1} parent=1 // pred_fallthru
      _
    %34 = sfence
    %v35 = vld [vmem:[#allocation6] sm:$0xf]
    %v36 = vlaneseq
    %v37 = vand.u32 %v36, 127
    %v38 = vadd.s32 %v37, 128
    %vm39 = vcmp.lt.s32.totalorder %v37, 0
    %v40 = vsub.s32 0, %v37
    %v41 = vsel %vm39, %v40, %v37
    %v42 = vshrl.u32 %v41, 4
    %v43 = vand.u32 %v41, 15
    %v44 = vsub.s32 0, %v43
    %v45 = vsel %vm39, %v44, %v43
    %vm46 = vcmp.lt.s32.totalorder %v38, 0
    %v47 = vsub.s32 0, %v38
    %v48 = vsel %vm46, %v47, %v38
    %v49 = vshrl.u32 %v48, 4
    %v50 = vand.u32 %v48, 15
    %v51 = vsub.s32 0, %v50
    %v52 = vsel %vm46, %v51, %v50
    %vm53 = vcmp.ne.s32.totalorder %v45, 0
    %vm54 = vcmp.ne.s32.totalorder %v52, 0
    %vm55 = vcmp.lt.s32.totalorder %v45, 0
    %vm56 = vcmp.lt.s32.totalorder %v52, 0
    %vm57 = vmand %vm55, %vm53
    %vm58 = vmand %vm56, %vm54
    %v59 = vadd.s32 %v45, 16
    %v60 = vadd.s32 %v52, 16
    %v61 = vsel %vm57, %v59, %v45
    %v62 = vsel %vm58, %v60, %v52
    %vm63 = vcmp.ge.s32.totalorder %v61, 1
    %vm64 = vcmp.ge.s32.totalorder %v62, 1
    %vm65 = vcmp.le.s32.totalorder %v61, 14
    %vm66 = vcmp.le.s32.totalorder %v62, 14
    %vm67 = vcmp.ge.s32.totalorder %v37, 16
    %vm68 = vcmp.ge.s32.totalorder %v38, 16
    %vm69 = vcmp.lt.s32.totalorder %v37, 240
    %vm70 = vcmp.lt.s32.totalorder %v38, 240
    %v73 = vunpack.c.l.s4 1983009808
    %v74 = vunpack.c.0.s8 %v73
    %v75 = vlaneseq
    %v76 = vshrl.u32 %v75, 7
    %v77 = vsub.s32 %v74, %v76
    %v78 = vrot.slane %v35, %v77
    %v79 = vcombine.high %v78, %v78
    %82 = vrot.lane.b32.xlu0 %v78, 1
    %v83 = vpop.permute.xlu0 %82
    %84 = vrot.lane.b32.xlu0 %v79, 1
    %v85 = vpop.permute.xlu0 %84
    %vm86 = vcmp.lt.s32.totalorder %v37, 1
    %v87 = vsel %vm86, %v83, %v85
    %v88 = vsel %vm86, %v85, %v83
    %v89 = vsel %vm63, %v88, 0.0
    %v90 = vsel %vm64, %v87, 0.0
    %91 = vrot.lane.b32.xlu0 %v78, 127
    %v92 = vpop.permute.xlu0 %91
    %93 = vrot.lane.b32.xlu0 %v79, 127
    %v94 = vpop.permute.xlu0 %93
    %vm95 = vcmp.lt.s32.totalorder %v37, 127
    %v96 = vsel %vm95, %v92, %v94
    %v97 = vsel %vm95, %v94, %v92
    %v98 = vsel %vm65, %v96, 0.0
    %v99 = vsel %vm66, %v97, 0.0
    %s100 = sld [smem:[#allocation2]]
    %s101 = sld [smem:[#allocation2 + $0x1]]
    %s102 = sld [smem:[#allocation2 + $0x2]]
    %s103 = sld [smem:[#allocation2 + $0x3]]
    %s104 = sld [smem:[#allocation2 + $0x4]]
    %s105 = sld [smem:[#allocation2 + $0x5]]
    %s106 = sld [smem:[#allocation2 + $0x6]]
    %s107 = sld [smem:[#allocation2 + $0x7]]
    %s108 = sld [smem:[#allocation2 + $0x8]]
    %v109 = vstv %s103
    %v110 = vmul.f32 %v109, %v89
    %v111 = vmul.f32 %v109, %v90
    %v112 = vstv %s104
    %v113 = vmul.f32 %v112, %v35
    %v116 = vunpack.c.l.s4 1983009808
    %v117 = vunpack.c.0.s8 %v116
    %v118 = vlaneseq
    %v119 = vshrl.u32 %v118, 7
    %v120 = vsub.s32 %v117, %v119
    %v121 = vrot.slane %v113, %v120
    %v122 = vcombine.high %v121, %v121
    %v125 = vadd.f32 %v110, %v121
    %v126 = vadd.f32 %v111, %v122
    %v127 = vstv %s105
    %v128 = vmul.f32 %v127, %v98
    %v129 = vmul.f32 %v127, %v99
    %v130 = vadd.f32 %v125, %v128
    %v131 = vadd.f32 %v126, %v129
    %v132 = vstv %s100
    %v133 = vmul.f32 %v132, %v89
    %v134 = vmul.f32 %v132, %v90
    %v135 = vstv %s101
    %v136 = vmul.f32 %v135, %v35
    %v139 = vunpack.c.l.s4 1983009808
    %v140 = vunpack.c.0.s8 %v139
    %v141 = vlaneseq
    %v142 = vshrl.u32 %v141, 7
    %v143 = vsub.s32 %v140, %v142
    %v144 = vrot.slane %v136, %v143
    %v145 = vcombine.high %v144, %v144
    %v148 = vadd.f32 %v133, %v144
    %v149 = vadd.f32 %v134, %v145
    %v150 = vstv %s102
    %v151 = vmul.f32 %v150, %v98
    %v152 = vmul.f32 %v150, %v99
    %v153 = vadd.f32 %v148, %v151
    %v154 = vadd.f32 %v149, %v152
    %155 = vrot.lane.b32.xlu0 %v153, 16
    %v156 = vpop.permute.xlu0 %155
    %157 = vrot.lane.b32.xlu0 %v154, 16
    %v158 = vpop.permute.xlu0 %157
    %vm159 = vcmp.lt.s32.totalorder %v37, 16
    %v160 = vsel %vm159, %v156, %v158
    %v161 = vsel %vm159, %v158, %v156
    %v162 = vsel %vm67, %v161, 0.0
    %v163 = vsel %vm68, %v160, 0.0
    %v164 = vadd.f32 %v130, %v162
    %v165 = vadd.f32 %v131, %v163
    %v166 = vstv %s106
    %v167 = vmul.f32 %v166, %v89
    %v168 = vmul.f32 %v166, %v90
    %v169 = vstv %s107
    %v170 = vmul.f32 %v169, %v35
    %v173 = vunpack.c.l.s4 1983009808
    %v174 = vunpack.c.0.s8 %v173
    %v175 = vlaneseq
    %v176 = vshrl.u32 %v175, 7
    %v177 = vsub.s32 %v174, %v176
    %v178 = vrot.slane %v170, %v177
    %v179 = vcombine.high %v178, %v178
    %v182 = vadd.f32 %v167, %v178
    %v183 = vadd.f32 %v168, %v179
    %v184 = vstv %s108
    %v185 = vmul.f32 %v184, %v98
    %v186 = vmul.f32 %v184, %v99
    %v187 = vadd.f32 %v182, %v185
    %v188 = vadd.f32 %v183, %v186
    %189 = vrot.lane.b32.xlu0 %v187, 112
    %v190 = vpop.permute.xlu0 %189
    %191 = vrot.lane.b32.xlu0 %v188, 112
    %v192 = vpop.permute.xlu0 %191
    %vm193 = vcmp.lt.s32.totalorder %v37, 112
    %v194 = vsel %vm193, %v190, %v192
    %v195 = vsel %vm193, %v192, %v190
    %v196 = vsel %vm69, %v194, 0.0
    %v197 = vsel %vm70, %v195, 0.0
    %v198 = vadd.f32 %v164, %v196
    %v199 = vadd.f32 %v165, %v197
    %v202 = vcombine.low %v198, %v199
    %v204 = vunpack.c.l.s4 1983009808
    %v205 = vunpack.c.0.s8 %v204
    %v206 = vlaneseq
    %v207 = vshrl.u32 %v206, 7
    %v208 = vsub.s32 %v205, %v207
    %v209 = vrot.slane %v202, %v208
    %211 = vst [vmem:[#allocation7] sm:$0xf] %v209
    // Predicated region
    $region18: #{tpu_custom_call.1} parent=1 // pred_check
      _
    $region19: #{tpu_custom_call.1} parent=1 // pred_check_branch
      %213 = sbr.rel (0) target = $region21
    $region20: #{tpu_custom_call.1} parent=1 // pred_region
      %s215 = ssub.s32 64, 64
      %216 = vsyncadd [#allocation4], %s215
      %s218 = sshll.u32 [#allocation7], 4
      %s219 = int_to_ptr.vmem [resolvable:$true] %s218
      %221 = dma.vmem_to_hbm [thread:$0]  %s219, 64, %s2, [#allocation4]
    $region21: #{tpu_custom_call.1} parent=1 // pred_fallthru
      _
    // Predicated region
    $region22: #{tpu_custom_call.1} parent=1 // pred_check
      _
    $region23: #{tpu_custom_call.1} parent=1 // pred_check_branch
      %223 = sbr.rel (0) target = $region25
    $region24: #{tpu_custom_call.1} parent=1 // pred_region
      %224 = dma.done [#allocation4], 64
    $region25: #{tpu_custom_call.1} parent=1 // pred_fallthru
      _
    %225 = vsyncpa [#allocation3], 1
    %226 = vsyncpa [#allocation4], 1
    %227 = vsyncpa [#allocation5], 1

</llo_original>
